<compile_context>
chip_gen: v5e
topology: v5e:2x2
jax: 0.10.0
libtpu: 0.0.40
codegen_flags: <defaults>
</compile_context>

<pallas_src>
import functools

import jax
import jax.numpy as jnp
from jax import lax
from jax.experimental import pallas as pl
from jax.experimental.pallas import tpu as pltpu


# ----------------------------------------------------------------------------
# helpers
# ----------------------------------------------------------------------------
def _round_up(n, m):
    return ((n + m - 1) // m) * m


def _pad_to(a, shape):
    pads = [(0, t - s) for s, t in zip(a.shape, shape)]
    return jnp.pad(a, pads)


def _pick_batch_tile(B, k_elems, bytes_per_elem=4, cap=256, vmem_budget=24 << 20):
    """Largest MXU-filling batch tile bounded by the double-buffered input size.

    - B <= cap: keep the whole batch in one block (full-dim block satisfies the
      (8,128) rule even when B is not a multiple of 8).
    - B  > cap: 256-row tiles (multiple of 8) fill the v6e/v7x MXU; the last
      partial tile is masked by Pallas.
    - Shrink in multiples of 8 only if 2 * bt * K * 4B exceeds the VMEM budget.
    """
    bt = B if B <= cap else cap
    while bt > 8 and 2 * bt * k_elems * bytes_per_elem > vmem_budget:
        bt = max(8, _round_up(bt // 2, 8))
    return bt
    # TODO(synk): on v7x (2 TensorCores) a small-batch latency-critical call
    # could use bt = cdiv(B, 2) to engage both cores; left as one block here.


def _vmem_limit(block_bytes):
    # double-buffered blocks + slack, floored at the v6e/v7x default (32 MiB),
    # capped below v7x physical VMEM (64 MiB) to leave headroom.
    need = 2 * block_bytes + (4 << 20)
    return int(min(48 << 20, max(32 << 20, need)))


# ----------------------------------------------------------------------------
# fused kernel bodies
# ----------------------------------------------------------------------------
def _forward_metric_kernel(x_ref, we_ref, wc_ref, o_ref, *, temperature, mxu_dtype):
    """logits = T * normalize(relu(GAP(x) @ We)) @ normalize(Wc)^T, fully fused.

    GAP is pre-folded into We (expanded to (C*HW, Fp) / HW in the wrapper) and
    Wc arrives pre-normalized and pre-transposed to (Fp, Cp).
    """
    x = x_ref[...]                                             # (bt, C*HW) f32
    we = we_ref[...]                                           # (C*HW, Fp)  bf16
    feat = lax.dot_general(x.astype(mxu_dtype), we,
                           (((1,), (0,)), ((), ())),
                           preferred_element_type=jnp.float32)  # (bt, Fp) f32
    feat = jnp.maximum(feat, 0.0)                              # ReLU (stand-in encoder)

    # F.normalize(p=2, eps=1e-12): x / max(||x||, eps) == x * rsqrt(max(ss, eps^2))
    eps2 = 1e-24
    rs_f = lax.rsqrt(jnp.maximum(jnp.sum(feat * feat, axis=-1, keepdims=True), eps2))
    rs_f = rs_f * temperature                                  # fold temperature in

    wc = wc_ref[...]                                           # (Fp, Cp) bf16, pre-normalized
    logits = lax.dot_general(feat.astype(mxu_dtype), wc,
                             (((1,), (0,)), ((), ())),
                             preferred_element_type=jnp.float32)  # (bt, Cp)
    o_ref[...] = (logits * rs_f).astype(o_ref.dtype)


def _encode_kernel(x_ref, we_ref, o_ref, *, mxu_dtype):
    x = x_ref[...]
    we = we_ref[...]
    feat = lax.dot_general(x.astype(mxu_dtype), we,
                           (((1,), (0,)), ((), ())),
                           preferred_element_type=jnp.float32)
    o_ref[...] = jnp.maximum(feat, 0.0).astype(o_ref.dtype)


# ----------------------------------------------------------------------------
# pallas_call wrappers
# ----------------------------------------------------------------------------
def fused_forward_metric(x2, we_exp, wc_t, temperature, mxu_dtype):
    B, K = x2.shape
    _, Fp = we_exp.shape
    _, Cp = wc_t.shape
    bt = _pick_batch_tile(B, K)

    in_bytes = bt * K * x2.dtype.itemsize
    we_bytes = we_exp.size * we_exp.dtype.itemsize
    wc_bytes = wc_t.size * wc_t.dtype.itemsize
    out_bytes = bt * Cp * 4
    vmem_limit = _vmem_limit(in_bytes + we_bytes + wc_bytes + out_bytes)

    cost = pl.CostEstimate(
        flops=2 * B * Fp * (K + Cp),
        transcendentals=0,
        bytes_accessed=x2.size * x2.dtype.itemsize + we_bytes + wc_bytes + B * Cp * 4,
    )

    kernel = functools.partial(_forward_metric_kernel,
                               temperature=float(temperature),
                               mxu_dtype=mxu_dtype)
    return pl.pallas_call(
        kernel,
        out_shape=jax.ShapeDtypeStruct((B, Cp), jnp.float32),
        grid=(pl.cdiv(B, bt),),
        in_specs=[
            pl.BlockSpec((bt, K), lambda i: (i, 0)),
            pl.BlockSpec((K, Fp), lambda i: (0, 0)),
            pl.BlockSpec((Fp, Cp), lambda i: (0, 0)),
        ],
        out_specs=pl.BlockSpec((bt, Cp), lambda i: (i, 0)),
        compiler_params=pltpu.CompilerParams(
            dimension_semantics=("parallel",),
            vmem_limit_bytes=vmem_limit),
        cost_estimate=cost,
    )(x2, we_exp, wc_t)


def fused_encode(x2, we_exp, mxu_dtype):
    B, K = x2.shape
    _, Fp = we_exp.shape
    bt = _pick_batch_tile(B, K)

    in_bytes = bt * K * x2.dtype.itemsize
    we_bytes = we_exp.size * we_exp.dtype.itemsize
    out_bytes = bt * Fp * 4
    vmem_limit = _vmem_limit(in_bytes + we_bytes + out_bytes)

    cost = pl.CostEstimate(
        flops=2 * B * Fp * K,
        transcendentals=0,
        bytes_accessed=x2.size * x2.dtype.itemsize + we_bytes + B * Fp * 4,
    )

    kernel = functools.partial(_encode_kernel, mxu_dtype=mxu_dtype)
    return pl.pallas_call(
        kernel,
        out_shape=jax.ShapeDtypeStruct((B, Fp), jnp.float32),
        grid=(pl.cdiv(B, bt),),
        in_specs=[
            pl.BlockSpec((bt, K), lambda i: (i, 0)),
            pl.BlockSpec((K, Fp), lambda i: (0, 0)),
        ],
        out_specs=pl.BlockSpec((bt, Fp), lambda i: (i, 0)),
        compiler_params=pltpu.CompilerParams(
            dimension_semantics=("parallel",),
            vmem_limit_bytes=vmem_limit),
        cost_estimate=cost,
    )(x2, we_exp)


# ----------------------------------------------------------------------------
# MYNET wrapper (JAX glue around the fused Pallas kernels)
# ----------------------------------------------------------------------------
class MYNETPallas:
    def __init__(self, num_classes=16, feature_dim=32, in_channels=3,
                 temperature=16.0, mode=None, mxu_dtype=jnp.bfloat16,
                 key=jax.random.PRNGKey(0)):
        self.mode = mode
        self.temperature = temperature
        self.num_classes = num_classes
        self.feature_dim = feature_dim
        self.in_channels = in_channels
        self.mxu_dtype = mxu_dtype

        k1, k2 = jax.random.split(key)
        # TODO(synk): resnet18/resnet20 backbone is an external module; replaced
        # by a deterministic stand-in encoder (GAP + linear + ReLU) fused here.
        self.w_enc = jax.random.normal(k1, (feature_dim, in_channels),
                                       dtype=jnp.float32) * 0.1
        # nn.Linear(feature_dim, num_classes, bias=False).weight
        self.w_cls = jax.random.normal(k2, (num_classes, feature_dim),
                                       dtype=jnp.float32) * 0.1

        # lane padding for F and num_classes (padded rows/cols are zeros -> they
        # contribute nothing and their cosine logits are exactly 0; the wrapper
        # slices them off right after the kernel call).
        self.f_pad = _round_up(feature_dim, 128)
        self.c_pad = _round_up(num_classes, 128)

        # pre-normalize the classifier rows (static weights) and store in
        # MXU-canonical (Fp, Cp) orientation so no per-step norm / transpose
        # happens inside the kernel.
        norm = jnp.sqrt(jnp.sum(self.w_cls * self.w_cls, axis=-1, keepdims=True))
        wc_n = self.w_cls / jnp.maximum(norm, 1e-12)
        wc_n_p = _pad_to(wc_n, (self.c_pad, self.f_pad))          # (Cp, Fp)
        self.w_cls_norm_t = jnp.transpose(wc_n_p).astype(mxu_dtype)  # (Fp, Cp)

        # cache of GAP-folded encoder weights, keyed by spatial size H*W
        self._we_cache = {}

    def _w_enc_expanded(self, hw):
        """GAP folded into the projection: (C*HW, Fp) = repeat(w_enc^T, HW)/HW."""
        if hw not in self._we_cache:
            we_t = jnp.transpose(self.w_enc)                       # (C, F)
            we_exp = jnp.repeat(we_t, hw, axis=0) / float(hw)      # (C*HW, F)
            we_exp = _pad_to(we_exp, (self.in_channels * hw, self.f_pad))
            self._we_cache[hw] = we_exp.astype(self.mxu_dtype)
        return self._we_cache[hw]

    @staticmethod
    def _flatten(x):
        B, C, H, W = x.shape
        return x.reshape(B, C * H * W), H * W

    def forward_metric(self, x):
        x2, hw = self._flatten(x)
        we_exp = self._w_enc_expanded(hw)
        logits_p = fused_forward_metric(x2, we_exp, self.w_cls_norm_t,
                                        self.temperature, self.mxu_dtype)
        # keep the slice adjacent to the kernel: padded class columns are 0
        return logits_p[:, :self.num_classes]

    def encode(self, x):
        # stand-in encoder already returns pooled (B, F) features, so the extra
        # adaptive_avg_pool2d(., 1) in the reference is a no-op here.
        x2, hw = self._flatten(x)
        we_exp = self._w_enc_expanded(hw)
        feat_p = fused_encode(x2, we_exp, self.mxu_dtype)
        return feat_p[:, :self.feature_dim]

    def __call__(self, x):
        if self.mode != 'encoder':
            return self.forward_metric(x)
        return self.encode(x)


if __name__ == "__main__":
    key = jax.random.PRNGKey(0)
    k_x, k_p = jax.random.split(key)

    # Small deterministic input: batch=2, channels=3, spatial=16x16 (NCHW)
    x = jax.random.normal(k_x, (2, 3, 16, 16), dtype=jnp.float32)

    net = MYNETPallas(num_classes=16, feature_dim=32, in_channels=3,
                      temperature=16.0, mode=None, key=k_p)
    logits = net(x)                 # forward_metric path (mode != 'encoder')

    net_enc = MYNETPallas(num_classes=16, feature_dim=32, in_channels=3,
                          temperature=16.0, mode='encoder', key=k_p)
    feats = net_enc(x)

    jax.block_until_ready(logits)
    jax.block_until_ready(feats)

    assert logits.shape == (2, 16)
    assert feats.shape == (2, 32)
    # cosine similarities scaled by temperature must lie in (approximately) [-T, T]
    assert bool(jnp.all(jnp.abs(logits) <= 16.0 * (1.0 + 1e-2)))

    print("KERNEL_OK")
</pallas_src>

<mosaic_0001>
module attributes {stable_mosaic.version = 11 : i64} {
  func.func @_forward_metric_kernel(%arg0: i32, %arg1: memref<2x768xf32, #tpu.memory_space<vmem>>, %arg2: memref<768x128xbf16, #tpu.memory_space<vmem>>, %arg3: memref<128x128xbf16, #tpu.memory_space<vmem>>, %arg4: memref<2x128xf32, #tpu.memory_space<vmem>>) attributes {dimension_semantics = [#tpu.dimension_semantics<parallel>], iteration_bounds = array<i64: 1>, scalar_prefetch = 0 : i64, scratch_operands = 0 : i64, tpu.core_type = #tpu.core_type<tc>, window_params = [{transform_indices = @transform_0, window_bounds = array<i64: 2, 768>}, {pipeline_mode = #tpu.pipeline_mode<synchronous>, transform_indices = @transform_1, window_bounds = array<i64: 768, 128>}, {pipeline_mode = #tpu.pipeline_mode<synchronous>, transform_indices = @transform_2, window_bounds = array<i64: 128, 128>}, {transform_indices = @transform_3, window_bounds = array<i64: 2, 128>}]} {
    %c0 = arith.constant 0 : index
    %c0_0 = arith.constant 0 : index
    %0 = vector.load %arg1[%c0, %c0_0] : memref<2x768xf32, #tpu.memory_space<vmem>>, vector<2x768xf32>
    %c0_1 = arith.constant 0 : index
    %c0_2 = arith.constant 0 : index
    %1 = vector.load %arg2[%c0_1, %c0_2] : memref<768x128xbf16, #tpu.memory_space<vmem>>, vector<768x128xbf16>
    %2 = arith.truncf %0 : vector<2x768xf32> to vector<2x768xbf16>
    %cst = arith.constant dense<0.000000e+00> : vector<2x128xf32>
    %3 = tpu.matmul %2, %1, %cst {dimension_numbers = #tpu.dot_dimension_numbers<[1], [0], [0], [1], [0, 0, 1, 1], [], []>} : vector<2x768xbf16>, vector<768x128xbf16>, vector<2x128xf32> -> vector<2x128xf32>
    %cst_3 = arith.constant 0.000000e+00 : f32
    %4 = vector.broadcast %cst_3 : f32 to vector<2x128xf32>
    %5 = arith.maximumf %3, %4 : vector<2x128xf32>
    %6 = arith.mulf %5, %5 : vector<2x128xf32>
    %cst_4 = arith.constant dense<0.000000e+00> : vector<2xf32>
    %7 = vector.multi_reduction <add>, %6, %cst_4 [1] : vector<2x128xf32> to vector<2xf32>
    %8 = vector.shape_cast %7 : vector<2xf32> to vector<2x1xf32>
    %cst_5 = arith.constant 1.000000e-24 : f32
    %9 = vector.broadcast %cst_5 : f32 to vector<2x1xf32>
    %10 = arith.maximumf %8, %9 : vector<2x1xf32>
    %11 = math.rsqrt %10 : vector<2x1xf32>
    %cst_6 = arith.constant 1.600000e+01 : f32
    %12 = vector.broadcast %cst_6 : f32 to vector<2x1xf32>
    %13 = arith.mulf %11, %12 : vector<2x1xf32>
    %c0_7 = arith.constant 0 : index
    %c0_8 = arith.constant 0 : index
    %14 = vector.load %arg3[%c0_7, %c0_8] : memref<128x128xbf16, #tpu.memory_space<vmem>>, vector<128x128xbf16>
    %15 = arith.truncf %5 : vector<2x128xf32> to vector<2x128xbf16>
    %cst_9 = arith.constant dense<0.000000e+00> : vector<2x128xf32>
    %16 = tpu.matmul %15, %14, %cst_9 {dimension_numbers = #tpu.dot_dimension_numbers<[1], [0], [0], [1], [0, 0, 1, 1], [], []>} : vector<2x128xbf16>, vector<128x128xbf16>, vector<2x128xf32> -> vector<2x128xf32>
    %17 = vector.broadcast %13 : vector<2x1xf32> to vector<2x128xf32>
    %18 = arith.mulf %16, %17 : vector<2x128xf32>
    %c0_10 = arith.constant 0 : index
    %c0_11 = arith.constant 0 : index
    %19 = vector.load %arg4[%c0_10, %c0_11] : memref<2x128xf32, #tpu.memory_space<vmem>>, vector<2x128xf32>
    tpu.vector_store %arg4[%c0_10, %c0_11], %18 {strides = array<i32>} : memref<2x128xf32, #tpu.memory_space<vmem>>, vector<2x128xf32>,
    return
  }
  func.func @transform_0(%arg0: i32) -> (i32, i32) {
    %c0_i32 = arith.constant 0 : i32
    %c0_i32_0 = arith.constant 0 : i32
    return %arg0, %c0_i32 : i32, i32
  }
  func.func @transform_1(%arg0: i32) -> (i32, i32) {
    %c0_i32 = arith.constant 0 : i32
    %c0_i32_0 = arith.constant 0 : i32
    %c0_i32_1 = arith.constant 0 : i32
    return %c0_i32, %c0_i32_0 : i32, i32
  }
  func.func @transform_2(%arg0: i32) -> (i32, i32) {
    %c0_i32 = arith.constant 0 : i32
    %c0_i32_0 = arith.constant 0 : i32
    %c0_i32_1 = arith.constant 0 : i32
    return %c0_i32, %c0_i32_0 : i32, i32
  }
  func.func @transform_3(%arg0: i32) -> (i32, i32) {
    %c0_i32 = arith.constant 0 : i32
    %c0_i32_0 = arith.constant 0 : i32
    return %arg0, %c0_i32 : i32, i32
  }
}

</mosaic_0001>

<llo_original>
// kernel: tpu_custom_call.1
$region0: #{tpu_custom_call.1}
  #allocation0 [shape = 'u32[]', space=smem, size = 0x4, offset = 0x4, fixed_abs, tag = 'smem constant byte address 0x4 - core index']
  #allocation1 [shape = 'u32[72,128]{1,0:T(1,128)}', space=vmem, size = 0x9000, scoped, tag = 'internal scratch']
  %s0 = inlined_call_operand.hbm [shape: f32[2,768], index: 0, kind: input, shape index: {}]
  %s1 = inlined_call_operand.hbm [shape: bf16[768,128], index: 1, kind: input, shape index: {}]
  %s2 = inlined_call_operand.hbm [shape: bf16[128,128], index: 2, kind: input, shape index: {}]
  %s3 = inlined_call_operand.hbm [shape: f32[2,128], index: 3, kind: output, shape index: {}]
  %s4 = sld [smem:[#allocation0]]
  $region34: #{tpu_custom_call.1} parent=0
    _
  %s6 = ssub.s32 1, %s4
  %s7 = scalar_select 0, %s6, %s4
  $region1: #{tpu_custom_call.1} parent=0
    #allocation2 [shape = 'u8[6144]{0}', space=vmem, size = 0x1800, scoped, tag = 'input window, operand 0, single buffered']
    #allocation3 [shape = 's32[1]{0}', space=sflag, size = 0x4, scoped, tag = 'scoped memory for tpu_custom_call.1']
    #allocation4 [shape = 's32[1]{0}', space=sflag, size = 0x4, scoped, tag = 'scoped memory for tpu_custom_call.1']
    #allocation5 [shape = 'u8[196608]{0}', space=vmem, size = 0x30000, scoped, tag = 'input window, operand 1, single buffered']
    #allocation6 [shape = 's32[1]{0}', space=sflag, size = 0x4, scoped, tag = 'scoped memory for tpu_custom_call.1']
    #allocation7 [shape = 'u8[32768]{0}', space=vmem, size = 0x8000, scoped, tag = 'input window, operand 2, single buffered']
    #allocation8 [shape = 'u8[1024]{0}', space=vmem, size = 0x400, scoped, tag = 'output window, operand 0, single buffered']
    %8 = vsyncpa [#allocation3], 0
    %9 = vsyncpa [#allocation6], 0
    %10 = vsyncpa [#allocation4], 0
    // Predicated region
    $region2: #{tpu_custom_call.1} parent=1 // pred_check
      _
    $region3: #{tpu_custom_call.1} parent=1 // pred_check_branch
      %12 = sbr.rel (0) target = $region5
    $region4: #{tpu_custom_call.1} parent=1 // pred_region
      %14 = vsyncadd [#allocation3], 0
      %s16 = sshll.u32 %s0, 4
      %s17 = int_to_ptr.hbm [resolvable:$true] %s16
      %s18 = sshll.u32 [#allocation2], 4
      %s19 = int_to_ptr.vmem [resolvable:$true] %s18
      %21 = dma.hbm_to_vmem [thread:$0]  %s17, 192, %s19, [#allocation3]
    $region5: #{tpu_custom_call.1} parent=1 // pred_fallthru
      _
    // Predicated region
    $region6: #{tpu_custom_call.1} parent=1 // pred_check
      _
    $region7: #{tpu_custom_call.1} parent=1 // pred_check_branch
      %23 = sbr.rel (0) target = $region9
    $region8: #{tpu_custom_call.1} parent=1 // pred_region
      %25 = vsyncadd [#allocation6], 0
      %s26 = sshll.u32 %s1, 4
      %s27 = int_to_ptr.hbm [resolvable:$true] %s26
      %s28 = sshll.u32 [#allocation5], 4
      %s29 = int_to_ptr.vmem [resolvable:$true] %s28
      %34 = dma.hbm_to_vmem [thread:$0]  %s27, 6144, %s29, [#allocation6], 64, 64, 4
    $region9: #{tpu_custom_call.1} parent=1 // pred_fallthru
      _
    // Predicated region
    $region10: #{tpu_custom_call.1} parent=1 // pred_check
      _
    $region11: #{tpu_custom_call.1} parent=1 // pred_check_branch
      %36 = sbr.rel (0) target = $region13
    $region12: #{tpu_custom_call.1} parent=1 // pred_region
      %38 = vsyncadd [#allocation6], 0
      %s39 = sshll.u32 %s2, 4
      %s40 = int_to_ptr.hbm [resolvable:$true] %s39
      %s41 = sshll.u32 [#allocation7], 4
      %s42 = int_to_ptr.vmem [resolvable:$true] %s41
      %47 = dma.hbm_to_vmem [thread:$0]  %s40, 1024, %s42, [#allocation6], 64, 64, 4
    $region13: #{tpu_custom_call.1} parent=1 // pred_fallthru
      _
    // Predicated region
    $region14: #{tpu_custom_call.1} parent=1 // pred_check
      _
    $region15: #{tpu_custom_call.1} parent=1 // pred_check_branch
      %49 = sbr.rel (0) target = $region17
    $region16: #{tpu_custom_call.1} parent=1 // pred_region
      %51 = dma.done [#allocation3], 192
    $region17: #{tpu_custom_call.1} parent=1 // pred_fallthru
      _
    // Predicated region
    $region18: #{tpu_custom_call.1} parent=1 // pred_check
      _
    $region19: #{tpu_custom_call.1} parent=1 // pred_check_branch
      %53 = sbr.rel (0) target = $region21
    $region20: #{tpu_custom_call.1} parent=1 // pred_region
      %55 = dma.done [#allocation6], 6144
    $region21: #{tpu_custom_call.1} parent=1 // pred_fallthru
      _
    // Predicated region
    $region22: #{tpu_custom_call.1} parent=1 // pred_check
      _
    $region23: #{tpu_custom_call.1} parent=1 // pred_check_branch
      %57 = sbr.rel (0) target = $region25
    $region24: #{tpu_custom_call.1} parent=1 // pred_region
      %59 = dma.done [#allocation6], 1024
    $region25: #{tpu_custom_call.1} parent=1 // pred_fallthru
      _
    %v60 = vld [vmem:[#allocation2] sm:$0xff]
    %v61 = vld [vmem:[#allocation2 + $0x8] sm:$0xf]
    %v62 = vld [vmem:[#allocation5] sm:$0xf]
    %v63 = vld [vmem:[#allocation5 + $0x4] sm:$0xf]
    %v64 = vld [vmem:[#allocation5 + $0x8] sm:$0xf]
    %v65 = vld [vmem:[#allocation5 + $0xc] sm:$0xf]
    %v66 = vld [vmem:[#allocation5 + $0x10] sm:$0xf]
    %v67 = vld [vmem:[#allocation5 + $0x14] sm:$0xf]
    %v68 = vld [vmem:[#allocation5 + $0x18] sm:$0xf]
    %v69 = vld [vmem:[#allocation5 + $0x1c] sm:$0xf]
    %v70 = vld [vmem:[#allocation5 + $0x20] sm:$0xf]
    %v71 = vld [vmem:[#allocation5 + $0x24] sm:$0xf]
    %v72 = vld [vmem:[#allocation5 + $0x28] sm:$0xf]
    %v73 = vld [vmem:[#allocation5 + $0x2c] sm:$0xf]
    %v74 = vld [vmem:[#allocation5 + $0x30] sm:$0xf]
    %v75 = vld [vmem:[#allocation5 + $0x34] sm:$0xf]
    %v76 = vld [vmem:[#allocation5 + $0x38] sm:$0xf]
    %v77 = vld [vmem:[#allocation5 + $0x3c] sm:$0xf]
    %v78 = vld [vmem:[#allocation5 + $0x40] sm:$0xf]
    %v79 = vld [vmem:[#allocation5 + $0x44] sm:$0xf]
    %v80 = vld [vmem:[#allocation5 + $0x48] sm:$0xf]
    %v81 = vld [vmem:[#allocation5 + $0x4c] sm:$0xf]
    %v82 = vld [vmem:[#allocation5 + $0x50] sm:$0xf]
    %v83 = vld [vmem:[#allocation5 + $0x54] sm:$0xf]
    %v84 = vld [vmem:[#allocation5 + $0x58] sm:$0xf]
    %v85 = vld [vmem:[#allocation5 + $0x5c] sm:$0xf]
    %v86 = vld [vmem:[#allocation5 + $0x60] sm:$0xf]
    %v87 = vld [vmem:[#allocation5 + $0x64] sm:$0xf]
    %v88 = vld [vmem:[#allocation5 + $0x68] sm:$0xf]
    %v89 = vld [vmem:[#allocation5 + $0x6c] sm:$0xf]
    %v90 = vld [vmem:[#allocation5 + $0x70] sm:$0xf]
    %v91 = vld [vmem:[#allocation5 + $0x74] sm:$0xf]
    %v92 = vld [vmem:[#allocation5 + $0x78] sm:$0xf]
    %v93 = vld [vmem:[#allocation5 + $0x7c] sm:$0xf]
    %v94 = vld [vmem:[#allocation5 + $0x80] sm:$0xf]
    %v95 = vld [vmem:[#allocation5 + $0x84] sm:$0xf]
    %v96 = vld [vmem:[#allocation5 + $0x88] sm:$0xf]
    %v97 = vld [vmem:[#allocation5 + $0x8c] sm:$0xf]
    %v98 = vld [vmem:[#allocation5 + $0x90] sm:$0xf]
    %v99 = vld [vmem:[#allocation5 + $0x94] sm:$0xf]
    %v100 = vld [vmem:[#allocation5 + $0x98] sm:$0xf]
    %v101 = vld [vmem:[#allocation5 + $0x9c] sm:$0xf]
    %v102 = vld [vmem:[#allocation5 + $0xa0] sm:$0xf]
    %v103 = vld [vmem:[#allocation5 + $0xa4] sm:$0xf]
    %v104 = vld [vmem:[#allocation5 + $0xa8] sm:$0xf]
    %v105 = vld [vmem:[#allocation5 + $0xac] sm:$0xf]
    %v106 = vld [vmem:[#allocation5 + $0xb0] sm:$0xf]
    %v107 = vld [vmem:[#allocation5 + $0xb4] sm:$0xf]
    %v108 = vld [vmem:[#allocation5 + $0xb8] sm:$0xf]
    %v109 = vld [vmem:[#allocation5 + $0xbc] sm:$0xf]
    %v110 = vld [vmem:[#allocation5 + $0xc0] sm:$0xf]
    %v111 = vld [vmem:[#allocation5 + $0xc4] sm:$0xf]
    %v112 = vld [vmem:[#allocation5 + $0xc8] sm:$0xf]
    %v113 = vld [vmem:[#allocation5 + $0xcc] sm:$0xf]
    %v114 = vld [vmem:[#allocation5 + $0xd0] sm:$0xf]
    %v115 = vld [vmem:[#allocation5 + $0xd4] sm:$0xf]
    %v116 = vld [vmem:[#allocation5 + $0xd8] sm:$0xf]
    %v117 = vld [vmem:[#allocation5 + $0xdc] sm:$0xf]
    %v118 = vld [vmem:[#allocation5 + $0xe0] sm:$0xf]
    %v119 = vld [vmem:[#allocation5 + $0xe4] sm:$0xf]
    %v120 = vld [vmem:[#allocation5 + $0xe8] sm:$0xf]
    %v121 = vld [vmem:[#allocation5 + $0xec] sm:$0xf]
    %v122 = vld [vmem:[#allocation5 + $0xf0] sm:$0xf]
    %v123 = vld [vmem:[#allocation5 + $0xf4] sm:$0xf]
    %v124 = vld [vmem:[#allocation5 + $0xf8] sm:$0xf]
    %v125 = vld [vmem:[#allocation5 + $0xfc] sm:$0xf]
    %v126 = vld [vmem:[#allocation5 + $0x100] sm:$0xf]
    %v127 = vld [vmem:[#allocation5 + $0x104] sm:$0xf]
    %v128 = vld [vmem:[#allocation5 + $0x108] sm:$0xf]
    %v129 = vld [vmem:[#allocation5 + $0x10c] sm:$0xf]
    %v130 = vld [vmem:[#allocation5 + $0x110] sm:$0xf]
    %v131 = vld [vmem:[#allocation5 + $0x114] sm:$0xf]
    %v132 = vld [vmem:[#allocation5 + $0x118] sm:$0xf]
    %v133 = vld [vmem:[#allocation5 + $0x11c] sm:$0xf]
    %v134 = vld [vmem:[#allocation5 + $0x120] sm:$0xf]
    %v135 = vld [vmem:[#allocation5 + $0x124] sm:$0xf]
    %v136 = vld [vmem:[#allocation5 + $0x128] sm:$0xf]
    %v137 = vld [vmem:[#allocation5 + $0x12c] sm:$0xf]
    %v138 = vld [vmem:[#allocation5 + $0x130] sm:$0xf]
    %v139 = vld [vmem:[#allocation5 + $0x134] sm:$0xf]
    %v140 = vld [vmem:[#allocation5 + $0x138] sm:$0xf]
    %v141 = vld [vmem:[#allocation5 + $0x13c] sm:$0xf]
    %v142 = vld [vmem:[#allocation5 + $0x140] sm:$0xf]
    %v143 = vld [vmem:[#allocation5 + $0x144] sm:$0xf]
    %v144 = vld [vmem:[#allocation5 + $0x148] sm:$0xf]
    %v145 = vld [vmem:[#allocation5 + $0x14c] sm:$0xf]
    %v146 = vld [vmem:[#allocation5 + $0x150] sm:$0xf]
    %v147 = vld [vmem:[#allocation5 + $0x154] sm:$0xf]
    %v148 = vld [vmem:[#allocation5 + $0x158] sm:$0xf]
    %v149 = vld [vmem:[#allocation5 + $0x15c] sm:$0xf]
    %v150 = vld [vmem:[#allocation5 + $0x160] sm:$0xf]
    %v151 = vld [vmem:[#allocation5 + $0x164] sm:$0xf]
    %v152 = vld [vmem:[#allocation5 + $0x168] sm:$0xf]
    %v153 = vld [vmem:[#allocation5 + $0x16c] sm:$0xf]
    %v154 = vld [vmem:[#allocation5 + $0x170] sm:$0xf]
    %v155 = vld [vmem:[#allocation5 + $0x174] sm:$0xf]
    %v156 = vld [vmem:[#allocation5 + $0x178] sm:$0xf]
    %v157 = vld [vmem:[#allocation5 + $0x17c] sm:$0xf]
    %160 = vst [vmem:[#allocation1] ss:$4 sm:$0xff] %v60
    %s161 = scalar_lea.vmem [#allocation1], 32
    %162 = vst [vmem:[%s161] ss:$4 sm:$0xff] %v61
    %v163 = vld.sshfl [vmem:[#allocation1] sm:$0xff pattern:$0x73625140]
    %v164 = vld.sshfl [vmem:[#allocation1 + $0x8] sm:$0xff pattern:$0x73625140]
    %v165 = vld.sshfl [vmem:[#allocation1 + $0x10] sm:$0xff pattern:$0x73625140]
    %v166 = vld.sshfl [vmem:[#allocation1 + $0x18] sm:$0xff pattern:$0x73625140]
    %v167 = vld.sshfl [vmem:[#allocation1 + $0x20] sm:$0xff pattern:$0x73625140]
    %v168 = vld.sshfl [vmem:[#allocation1 + $0x28] sm:$0xff pattern:$0x73625140]
    %v175 = vpack.c.bf16 %v163, %v163
    %v176 = vpack.c.bf16 %v164, %v164
    %v177 = vpack.c.bf16 %v165, %v165
    %v178 = vpack.c.bf16 %v166, %v166
    %v179 = vpack.c.bf16 %v167, %v167
    %v180 = vpack.c.bf16 %v168, %v168
    %v277 = vunpack.c.l.b16 %v62
    %v278 = vunpack.c.l.b16 %v63
    %v279 = vunpack.c.l.b16 %v64
    %v280 = vunpack.c.l.b16 %v65
    %v281 = vunpack.c.l.b16 %v66
    %v282 = vunpack.c.l.b16 %v67
    %v283 = vunpack.c.l.b16 %v68
    %v284 = vunpack.c.l.b16 %v69
    %v285 = vunpack.c.l.b16 %v70
    %v286 = vunpack.c.l.b16 %v71
    %v287 = vunpack.c.l.b16 %v72
    %v288 = vunpack.c.l.b16 %v73
    %v289 = vunpack.c.l.b16 %v74
    %v290 = vunpack.c.l.b16 %v75
    %v291 = vunpack.c.l.b16 %v76
    %v292 = vunpack.c.l.b16 %v77
    %v293 = vunpack.c.l.b16 %v78
    %v294 = vunpack.c.l.b16 %v79
    %v295 = vunpack.c.l.b16 %v80
    %v296 = vunpack.c.l.b16 %v81
    %v297 = vunpack.c.l.b16 %v82
    %v298 = vunpack.c.l.b16 %v83
    %v299 = vunpack.c.l.b16 %v84
    %v300 = vunpack.c.l.b16 %v85
    %v301 = vunpack.c.l.b16 %v86
    %v302 = vunpack.c.l.b16 %v87
    %v303 = vunpack.c.l.b16 %v88
    %v304 = vunpack.c.l.b16 %v89
    %v305 = vunpack.c.l.b16 %v90
    %v306 = vunpack.c.l.b16 %v91
    %v307 = vunpack.c.l.b16 %v92
    %v308 = vunpack.c.l.b16 %v93
    %v309 = vunpack.c.l.b16 %v94
    %v310 = vunpack.c.l.b16 %v95
    %v311 = vunpack.c.l.b16 %v96
    %v312 = vunpack.c.l.b16 %v97
    %v313 = vunpack.c.l.b16 %v98
    %v314 = vunpack.c.l.b16 %v99
    %v315 = vunpack.c.l.b16 %v100
    %v316 = vunpack.c.l.b16 %v101
    %v317 = vunpack.c.l.b16 %v102
    %v318 = vunpack.c.l.b16 %v103
    %v319 = vunpack.c.l.b16 %v104
    %v320 = vunpack.c.l.b16 %v105
    %v321 = vunpack.c.l.b16 %v106
    %v322 = vunpack.c.l.b16 %v107
    %v323 = vunpack.c.l.b16 %v108
    %v324 = vunpack.c.l.b16 %v109
    %v325 = vunpack.c.l.b16 %v110
    %v326 = vunpack.c.l.b16 %v111
    %v327 = vunpack.c.l.b16 %v112
    %v328 = vunpack.c.l.b16 %v113
    %v329 = vunpack.c.l.b16 %v114
    %v330 = vunpack.c.l.b16 %v115
    %v331 = vunpack.c.l.b16 %v116
    %v332 = vunpack.c.l.b16 %v117
    %v333 = vunpack.c.l.b16 %v118
    %v334 = vunpack.c.l.b16 %v119
    %v335 = vunpack.c.l.b16 %v120
    %v336 = vunpack.c.l.b16 %v121
    %v337 = vunpack.c.l.b16 %v122
    %v338 = vunpack.c.l.b16 %v123
    %v339 = vunpack.c.l.b16 %v124
    %v340 = vunpack.c.l.b16 %v125
    %v341 = vunpack.c.l.b16 %v126
    %v342 = vunpack.c.l.b16 %v127
    %v343 = vunpack.c.l.b16 %v128
    %v344 = vunpack.c.l.b16 %v129
    %v345 = vunpack.c.l.b16 %v130
    %v346 = vunpack.c.l.b16 %v131
    %v347 = vunpack.c.l.b16 %v132
    %v348 = vunpack.c.l.b16 %v133
    %v349 = vunpack.c.l.b16 %v134
    %v350 = vunpack.c.l.b16 %v135
    %v351 = vunpack.c.l.b16 %v136
    %v352 = vunpack.c.l.b16 %v137
    %v353 = vunpack.c.l.b16 %v138
    %v354 = vunpack.c.l.b16 %v139
    %v355 = vunpack.c.l.b16 %v140
    %v356 = vunpack.c.l.b16 %v141
    %v357 = vunpack.c.l.b16 %v142
    %v358 = vunpack.c.l.b16 %v143
    %v359 = vunpack.c.l.b16 %v144
    %v360 = vunpack.c.l.b16 %v145
    %v361 = vunpack.c.l.b16 %v146
    %v362 = vunpack.c.l.b16 %v147
    %v363 = vunpack.c.l.b16 %v148
    %v364 = vunpack.c.l.b16 %v149
    %v365 = vunpack.c.l.b16 %v150
    %v366 = vunpack.c.l.b16 %v151
    %v367 = vunpack.c.l.b16 %v152
    %v368 = vunpack.c.l.b16 %v153
    %v369 = vunpack.c.l.b16 %v154
    %v370 = vunpack.c.l.b16 %v155
    %v371 = vunpack.c.l.b16 %v156
    %v372 = vunpack.c.l.b16 %v157
    %v373 = vpack.c.b16 %v278, %v277
    %v374 = vpack.c.b16 %v280, %v279
    %v375 = vpack.c.b16 %v282, %v281
    %v376 = vpack.c.b16 %v284, %v283
    %v377 = vpack.c.b16 %v286, %v285
    %v378 = vpack.c.b16 %v288, %v287
    %v379 = vpack.c.b16 %v290, %v289
    %v380 = vpack.c.b16 %v292, %v291
    %v381 = vpack.c.b16 %v294, %v293
    %v382 = vpack.c.b16 %v296, %v295
    %v383 = vpack.c.b16 %v298, %v297
    %v384 = vpack.c.b16 %v300, %v299
    %v385 = vpack.c.b16 %v302, %v301
    %v386 = vpack.c.b16 %v304, %v303
    %v387 = vpack.c.b16 %v306, %v305
    %v388 = vpack.c.b16 %v308, %v307
    %v389 = vpack.c.b16 %v310, %v309
    %v390 = vpack.c.b16 %v312, %v311
    %v391 = vpack.c.b16 %v314, %v313
    %v392 = vpack.c.b16 %v316, %v315
    %v393 = vpack.c.b16 %v318, %v317
    %v394 = vpack.c.b16 %v320, %v319
    %v395 = vpack.c.b16 %v322, %v321
    %v396 = vpack.c.b16 %v324, %v323
    %v397 = vpack.c.b16 %v326, %v325
    %v398 = vpack.c.b16 %v328, %v327
    %v399 = vpack.c.b16 %v330, %v329
    %v400 = vpack.c.b16 %v332, %v331
    %v401 = vpack.c.b16 %v334, %v333
    %v402 = vpack.c.b16 %v336, %v335
    %v403 = vpack.c.b16 %v338, %v337
    %v404 = vpack.c.b16 %v340, %v339
    %v405 = vpack.c.b16 %v342, %v341
    %v406 = vpack.c.b16 %v344, %v343
    %v407 = vpack.c.b16 %v346, %v345
    %v408 = vpack.c.b16 %v348, %v347
    %v409 = vpack.c.b16 %v350, %v349
    %v410 = vpack.c.b16 %v352, %v351
    %v411 = vpack.c.b16 %v354, %v353
    %v412 = vpack.c.b16 %v356, %v355
    %v413 = vpack.c.b16 %v358, %v357
    %v414 = vpack.c.b16 %v360, %v359
    %v415 = vpack.c.b16 %v362, %v361
    %v416 = vpack.c.b16 %v364, %v363
    %v417 = vpack.c.b16 %v366, %v365
    %v418 = vpack.c.b16 %v368, %v367
    %v419 = vpack.c.b16 %v370, %v369
    %v420 = vpack.c.b16 %v372, %v371
    %469 = vmatpush.bf16.msra.mxu0 %v380
    %470 = vmatpush.bf16.msra.mxu0 %v379
    %471 = vmatpush.bf16.msra.mxu0 %v378
    %472 = vmatpush.bf16.msra.mxu0 %v377
    %473 = vmatpush.bf16.msra.mxu0 %v376
    %474 = vmatpush.bf16.msra.mxu0 %v375
    %475 = vmatpush.bf16.msra.mxu0 %v374
    %476 = vmatpush.bf16.msra.mxu0 %v373
    %477 = vmatmul.bf16.gmra.mxu0 %v175
    %v478 = vpop.f32.mrf.mxu0
    %v479 = vadd.f32 0.0, %v478
    %v480 = vpop.f32.mrf.mxu0
    %481 = vdwg.mxu0
    %482 = vmatpush.bf16.msra.mxu0 %v388
    %483 = vmatpush.bf16.msra.mxu0 %v387
    %484 = vmatpush.bf16.msra.mxu0 %v386
    %485 = vmatpush.bf16.msra.mxu0 %v385
    %486 = vmatpush.bf16.msra.mxu0 %v384
    %487 = vmatpush.bf16.msra.mxu0 %v383
    %488 = vmatpush.bf16.msra.mxu0 %v382
    %489 = vmatpush.bf16.msra.mxu0 %v381
    %490 = vmatmul.bf16.gmra.mxu0 %v176
    %v491 = vpop.f32.mrf.mxu0
    %v492 = vadd.f32 %v479, %v491
    %v493 = vpop.f32.mrf.mxu0
    %494 = vdwg.mxu0
    %495 = vmatpush.bf16.msra.mxu0 %v396
    %496 = vmatpush.bf16.msra.mxu0 %v395
    %497 = vmatpush.bf16.msra.mxu0 %v394
    %498 = vmatpush.bf16.msra.mxu0 %v393
    %499 = vmatpush.bf16.msra.mxu0 %v392
    %500 = vmatpush.bf16.msra.mxu0 %v391
    %501 = vmatpush.bf16.msra.mxu0 %v390
    %502 = vmatpush.bf16.msra.mxu0 %v389
    %503 = vmatmul.bf16.gmra.mxu0 %v177
    %v504 = vpop.f32.mrf.mxu0
    %v505 = vadd.f32 %v492, %v504
    %v506 = vpop.f32.mrf.mxu0
    %507 = vdwg.mxu0
    %508 = vmatpush.bf16.msra.mxu0 %v404
    %509 = vmatpush.bf16.msra.mxu0 %v403
    %510 = vmatpush.bf16.msra.mxu0 %v402
    %511 = vmatpush.bf16.msra.mxu0 %v401
    %512 = vmatpush.bf16.msra.mxu0 %v400
    %513 = vmatpush.bf16.msra.mxu0 %v399
    %514 = vmatpush.bf16.msra.mxu0 %v398
    %515 = vmatpush.bf16.msra.mxu0 %v397
    %516 = vmatmul.bf16.gmra.mxu0 %v178
    %v517 = vpop.f32.mrf.mxu0
    %v518 = vadd.f32 %v505, %v517
    %v519 = vpop.f32.mrf.mxu0
    %520 = vdwg.mxu0
    %521 = vmatpush.bf16.msra.mxu0 %v412
    %522 = vmatpush.bf16.msra.mxu0 %v411
    %523 = vmatpush.bf16.msra.mxu0 %v410
    %524 = vmatpush.bf16.msra.mxu0 %v409
    %525 = vmatpush.bf16.msra.mxu0 %v408
    %526 = vmatpush.bf16.msra.mxu0 %v407
    %527 = vmatpush.bf16.msra.mxu0 %v406
    %528 = vmatpush.bf16.msra.mxu0 %v405
    %529 = vmatmul.bf16.gmra.mxu0 %v179
    %v530 = vpop.f32.mrf.mxu0
    %v531 = vadd.f32 %v518, %v530
    %v532 = vpop.f32.mrf.mxu0
    %533 = vdwg.mxu0
    %534 = vmatpush.bf16.msra.mxu0 %v420
    %535 = vmatpush.bf16.msra.mxu0 %v419
    %536 = vmatpush.bf16.msra.mxu0 %v418
    %537 = vmatpush.bf16.msra.mxu0 %v417
    %538 = vmatpush.bf16.msra.mxu0 %v416
    %539 = vmatpush.bf16.msra.mxu0 %v415
    %540 = vmatpush.bf16.msra.mxu0 %v414
    %541 = vmatpush.bf16.msra.mxu0 %v413
    %542 = vmatmul.bf16.gmra.mxu0 %v180
    %v543 = vpop.f32.mrf.mxu0
    %v544 = vadd.f32 %v531, %v543
    %v545 = vpop.f32.mrf.mxu0
    %546 = vdwg.mxu0
    %v547 = vmax.f32 %v544, 0.0
    %v548 = vmul.f32 %v547, %v547
    %vm549 = vcmask 1041408
    %v550 = vsel %vm549, %v548, 0.0
    %551 = vadd.xlane.f32.xlu0 %v550
    %v552 = vpop.xlane.xlu0 %551
    %v553 = vmax.f32 %v552, 1e-24
    %v554 = vrsqrt.pop %v553
    %v555 = vmul.f32 %v554, %v553
    %v556 = vmul.f32 %v555, %v554
    %v557 = vmul.f32 0.5, %v556
    %v558 = vsub.f32 1.5, %v557
    %v559 = vmul.f32 %v554, %v558
    %vm560 = vweird.f32 %v553
    %vm561 = vweird.f32 %v554
    %vm562 = vmor %vm560, %vm561
    %v563 = vsel %vm562, %v554, %v559
    %v564 = vmul.f32 %v563, 16.0
    %v565 = vld [vmem:[#allocation7] sm:$0xf]
    %v566 = vld [vmem:[#allocation7 + $0x4] sm:$0xf]
    %v567 = vld [vmem:[#allocation7 + $0x8] sm:$0xf]
    %v568 = vld [vmem:[#allocation7 + $0xc] sm:$0xf]
    %v569 = vld [vmem:[#allocation7 + $0x10] sm:$0xf]
    %v570 = vld [vmem:[#allocation7 + $0x14] sm:$0xf]
    %v571 = vld [vmem:[#allocation7 + $0x18] sm:$0xf]
    %v572 = vld [vmem:[#allocation7 + $0x1c] sm:$0xf]
    %v573 = vld [vmem:[#allocation7 + $0x20] sm:$0xf]
    %v574 = vld [vmem:[#allocation7 + $0x24] sm:$0xf]
    %v575 = vld [vmem:[#allocation7 + $0x28] sm:$0xf]
    %v576 = vld [vmem:[#allocation7 + $0x2c] sm:$0xf]
    %v577 = vld [vmem:[#allocation7 + $0x30] sm:$0xf]
    %v578 = vld [vmem:[#allocation7 + $0x34] sm:$0xf]
    %v579 = vld [vmem:[#allocation7 + $0x38] sm:$0xf]
    %v580 = vld [vmem:[#allocation7 + $0x3c] sm:$0xf]
    %v581 = vpack.c.bf16 %v547, %v547
    %v598 = vunpack.c.l.b16 %v565
    %v599 = vunpack.c.l.b16 %v566
    %v600 = vunpack.c.l.b16 %v567
    %v601 = vunpack.c.l.b16 %v568
    %v602 = vunpack.c.l.b16 %v569
    %v603 = vunpack.c.l.b16 %v570
    %v604 = vunpack.c.l.b16 %v571
    %v605 = vunpack.c.l.b16 %v572
    %v606 = vunpack.c.l.b16 %v573
    %v607 = vunpack.c.l.b16 %v574
    %v608 = vunpack.c.l.b16 %v575
    %v609 = vunpack.c.l.b16 %v576
    %v610 = vunpack.c.l.b16 %v577
    %v611 = vunpack.c.l.b16 %v578
    %v612 = vunpack.c.l.b16 %v579
    %v613 = vunpack.c.l.b16 %v580
    %v614 = vpack.c.b16 %v599, %v598
    %v615 = vpack.c.b16 %v601, %v600
    %v616 = vpack.c.b16 %v603, %v602
    %v617 = vpack.c.b16 %v605, %v604
    %v618 = vpack.c.b16 %v607, %v606
    %v619 = vpack.c.b16 %v609, %v608
    %v620 = vpack.c.b16 %v611, %v610
    %v621 = vpack.c.b16 %v613, %v612
    %630 = vmatpush.bf16.msra.mxu0 %v621
    %631 = vmatpush.bf16.msra.mxu0 %v620
    %632 = vmatpush.bf16.msra.mxu0 %v619
    %633 = vmatpush.bf16.msra.mxu0 %v618
    %634 = vmatpush.bf16.msra.mxu0 %v617
    %635 = vmatpush.bf16.msra.mxu0 %v616
    %636 = vmatpush.bf16.msra.mxu0 %v615
    %637 = vmatpush.bf16.msra.mxu0 %v614
    %638 = vmatmul.bf16.gmra.mxu0 %v581
    %v639 = vpop.f32.mrf.mxu0
    %v640 = vadd.f32 0.0, %v639
    %v641 = vpop.f32.mrf.mxu0
    %642 = vdwg.mxu0
    %v643 = vmul.f32 %v640, %v564
    %644 = vst [vmem:[#allocation8] sm:$0x3] %v643
    // Predicated region
    $region26: #{tpu_custom_call.1} parent=1 // pred_check
      _
    $region27: #{tpu_custom_call.1} parent=1 // pred_check_branch
      %646 = sbr.rel (0) target = $region29
    $region28: #{tpu_custom_call.1} parent=1 // pred_region
      %648 = vsyncadd [#allocation4], 0
      %s650 = sshll.u32 [#allocation8], 4
      %s651 = int_to_ptr.vmem [resolvable:$true] %s650
      %s652 = sshll.u32 %s3, 4
      %s653 = int_to_ptr.hbm [resolvable:$true] %s652
      %655 = dma.vmem_to_hbm [thread:$0]  %s651, 32, %s653, [#allocation4]
    $region29: #{tpu_custom_call.1} parent=1 // pred_fallthru
      _
    // Predicated region
    $region30: #{tpu_custom_call.1} parent=1 // pred_check
      _
    $region31: #{tpu_custom_call.1} parent=1 // pred_check_branch
      %657 = sbr.rel (0) target = $region33
    $region32: #{tpu_custom_call.1} parent=1 // pred_region
      %659 = dma.done [#allocation4], 32
    $region33: #{tpu_custom_call.1} parent=1 // pred_fallthru
      _
    %660 = vsyncpa [#allocation3], 1
    %661 = vsyncpa [#allocation6], 1
    %662 = vsyncpa [#allocation4], 1

</llo_original>
